<compile_context>
chip_gen: v7x
topology: tpu7x:2x2x1
jax: 0.10.0
libtpu: 0.0.40
codegen_flags: <defaults>
</compile_context>

<pallas_src>
import jax
import jax.numpy as jnp
from jax.experimental import pallas as pl
from jax.experimental.pallas import tpu as pltpu


def _round_up(x, m):
    return -(-x // m) * m


def _sublane_tile(itemsize):
    # Native sublane tile: 8 for 32-bit, 16 for 16-bit, 32 for 8-bit dtypes.
    return max(8, 32 // itemsize)


def _vmem_limit_bytes():
    # ~half of physical VMEM per generation (64 MiB on v5e/v6e, 32 MiB on v7x),
    # with a conservative fallback if the query is unavailable.
    try:
        cap = int(pltpu.get_tpu_info().vmem_capacity_bytes)
    except Exception:
        cap = 64 * 1024 * 1024
    return max(16 * 1024 * 1024, min(64 * 1024 * 1024, cap // 2))


def _pick_thw(per_lane_bytes, HW, budget):
    """Largest lane tile: a multiple of 128 (partial trailing block handled by
    a cdiv grid) or the full H*W extent, fitting double-buffered blocks in
    `budget` bytes."""
    max_lanes = max(128, (max(0, budget) // per_lane_bytes) // 128 * 128)
    if max_lanes >= HW:
        return HW            # single full-extent block (always layout-legal)
    return max_lanes         # multiple of 128, trailing block may be partial


def _folded_matmul_kernel(b_ref, w_ref, x_ref, o_ref):
    """out (nb, thw) = W_blockdiag (nb, nb*C) @ x (nb*C, thw) + bias.

    b_ref: (1, 1)        SMEM f32 bias
    w_ref: (nb, nb*C)    VMEM block-diagonal weights, resident across grid
    x_ref: (nb*C, thw)   VMEM feat slab (nb folded batch rows, dense loads)
    o_ref: (nb, thw)     VMEM output block (lane- and sublane-dense stores)
    """
    acc = jnp.dot(w_ref[...], x_ref[...], preferred_element_type=jnp.float32)
    o_ref[...] = (acc + b_ref[0, 0]).astype(o_ref.dtype)


def _per_image_kernel(b_ref, w_ref, x_ref, o_ref):
    """Large-C fallback: out (1,1,thw) = w (1,C) @ x[0] (C,thw) + bias."""
    acc = jnp.dot(w_ref[...], x_ref[0], preferred_element_type=jnp.float32)
    o_ref[0] = (acc + b_ref[0, 0]).astype(o_ref.dtype)


def get_logits_with_conv1(feat, weight, bias):
    """feat: (N, C, H, W); weight: (1, C, 1, 1); bias: (1,) -> (N, 1, H, W)."""
    N, C, H, W = feat.shape
    HW = H * W
    dtype = feat.dtype
    itemsize = jnp.dtype(dtype).itemsize
    sub = _sublane_tile(itemsize)

    vmem_limit = _vmem_limit_bytes()
    budget = int(vmem_limit * 0.65)            # double-buffered in+out blocks
    b2 = bias.reshape(1, 1).astype(jnp.float32)

    # ---------- Regime A: folded-batch, sublane-dense output ----------
    nb = N if N <= 8 else 8
    rows = nb * C
    rows_pad = _round_up(rows, sub)            # sublane-padded input rows
    out_pad = _round_up(nb, sub)               # sublane-padded output rows
    w_bytes = 2 * out_pad * _round_up(rows, 128) * itemsize
    per_lane = 2 * (rows_pad + out_pad) * itemsize
    want_lanes = min(512, _round_up(HW, 128))  # need a reasonably wide tile
    regime_a = per_lane * want_lanes + w_bytes <= budget

    if regime_a:
        thw = _pick_thw(per_lane, HW, budget - w_bytes)
        grid = (pl.cdiv(N, nb), pl.cdiv(HW, thw))
        # Keep >= 2 roughly equal spatial steps so a v7x megacore uses both TCs.
        if grid == (1, 1) and HW > 128:
            thw = _round_up(pl.cdiv(HW, 2), 128)
            grid = (grid[0], pl.cdiv(HW, thw))

        x2 = feat.reshape(N * C, HW)
        w_row = weight.reshape(1, C).astype(dtype)
        w_big = jnp.kron(jnp.eye(nb, dtype=dtype), w_row)      # (nb, nb*C)

        out = pl.pallas_call(
            _folded_matmul_kernel,
            out_shape=jax.ShapeDtypeStruct((N, HW), dtype),
            grid=grid,
            in_specs=[
                pl.BlockSpec(memory_space=pltpu.MemorySpace.SMEM),   # bias
                pl.BlockSpec((nb, nb * C), lambda n, t: (0, 0)),     # weights
                pl.BlockSpec((nb * C, thw), lambda n, t: (n, t)),    # feat slab
            ],
            out_specs=pl.BlockSpec((nb, thw), lambda n, t: (n, t)),
            compiler_params=pltpu.CompilerParams(
                dimension_semantics=("parallel", "parallel"),
                vmem_limit_bytes=vmem_limit,
            ),
        )(b2, w_big, x2)
        return out.reshape(N, 1, H, W)

    # ---------- Regime B: per-image fallback (very large nb*C) ----------
    rows_pad_b = _round_up(C, sub)
    per_lane_b = 2 * (rows_pad_b + sub) * itemsize
    w_bytes_b = 2 * sub * _round_up(C, 128) * itemsize
    thw = _pick_thw(per_lane_b, HW, budget - w_bytes_b)
    grid = (N, pl.cdiv(HW, thw))

    x3 = feat.reshape(N, C, HW)
    w_row = weight.reshape(1, C).astype(dtype)

    out = pl.pallas_call(
        _per_image_kernel,
        out_shape=jax.ShapeDtypeStruct((N, 1, HW), dtype),
        grid=grid,
        in_specs=[
            pl.BlockSpec(memory_space=pltpu.MemorySpace.SMEM),       # bias
            pl.BlockSpec((1, C), lambda n, t: (0, 0)),               # weights
            pl.BlockSpec((1, C, thw), lambda n, t: (n, 0, t)),       # feat block
        ],
        out_specs=pl.BlockSpec((1, 1, thw), lambda n, t: (n, 0, t)),
        compiler_params=pltpu.CompilerParams(
            dimension_semantics=("parallel", "parallel"),
            vmem_limit_bytes=vmem_limit,
        ),
    )(b2, w_row, x3)
    return out.reshape(N, 1, H, W)


if __name__ == "__main__":
    # Small shapes consistent with the module: batch=2, channels=4, spatial=16.
    N, C, H, W = 2, 4, 16, 16
    key = jax.random.PRNGKey(0)
    k_feat, k_w, k_b = jax.random.split(key, 3)

    feat = jax.random.normal(k_feat, (N, C, H, W), dtype=jnp.float32)
    # Deterministic synthetic parameters (Conv2d(channel, 1, kernel_size=1)).
    weight = jax.random.normal(k_w, (1, C, 1, 1), dtype=jnp.float32) * 0.1
    bias = jax.random.normal(k_b, (1,), dtype=jnp.float32) * 0.1

    logits = get_logits_with_conv1(feat, weight, bias)
    jax.block_until_ready(logits)

    # Reference check (plain JAX): 1x1 conv == channel contraction + bias.
    ref = jnp.einsum("nchw,c->nhw", feat, weight.reshape(C))[:, None] + bias[0]
    assert logits.shape == (N, 1, H, W)
    assert jnp.allclose(logits, ref, atol=1e-5, rtol=1e-4)

    print("KERNEL_OK")
</pallas_src>

<mosaic_0001>
module attributes {stable_mosaic.version = 11 : i64} {
  func.func @_folded_matmul_kernel(%arg0: i32, %arg1: i32, %arg2: memref<1x1xf32, #tpu.memory_space<smem>>, %arg3: memref<2x8xf32, #tpu.memory_space<vmem>>, %arg4: memref<8x128xf32, #tpu.memory_space<vmem>>, %arg5: memref<2x128xf32, #tpu.memory_space<vmem>>) attributes {dimension_semantics = [#tpu.dimension_semantics<parallel>, #tpu.dimension_semantics<parallel>], iteration_bounds = array<i64: 1, 2>, scalar_prefetch = 0 : i64, scratch_operands = 0 : i64, tpu.core_type = #tpu.core_type<tc>, window_params = [{transform_indices = @transform_0, window_bounds = array<i64: 1, 1>}, {pipeline_mode = #tpu.pipeline_mode<synchronous>, transform_indices = @transform_1, window_bounds = array<i64: 2, 8>}, {transform_indices = @transform_2, window_bounds = array<i64: 8, 128>}, {transform_indices = @transform_3, window_bounds = array<i64: 2, 128>}]} {
    %c0 = arith.constant 0 : index
    %c0_0 = arith.constant 0 : index
    %0 = vector.load %arg3[%c0, %c0_0] : memref<2x8xf32, #tpu.memory_space<vmem>>, vector<2x8xf32>
    %c0_1 = arith.constant 0 : index
    %c0_2 = arith.constant 0 : index
    %1 = vector.load %arg4[%c0_1, %c0_2] : memref<8x128xf32, #tpu.memory_space<vmem>>, vector<8x128xf32>
    %cst = arith.constant dense<0.000000e+00> : vector<2x128xf32>
    %2 = tpu.matmul %0, %1, %cst {dimension_numbers = #tpu.dot_dimension_numbers<[1], [0], [0], [1], [0, 0, 1, 1], [], []>} : vector<2x8xf32>, vector<8x128xf32>, vector<2x128xf32> -> vector<2x128xf32>
    %c0_3 = arith.constant 0 : index
    %c0_4 = arith.constant 0 : index
    %3 = memref.load %arg2[%c0_3, %c0_4] : memref<1x1xf32, #tpu.memory_space<smem>>
    %4 = vector.broadcast %3 : f32 to vector<2x128xf32>
    %5 = arith.addf %2, %4 : vector<2x128xf32>
    %c0_5 = arith.constant 0 : index
    %c0_6 = arith.constant 0 : index
    %6 = vector.load %arg5[%c0_5, %c0_6] : memref<2x128xf32, #tpu.memory_space<vmem>>, vector<2x128xf32>
    tpu.vector_store %arg5[%c0_5, %c0_6], %5 {strides = array<i32>} : memref<2x128xf32, #tpu.memory_space<vmem>>, vector<2x128xf32>,
    return
  }
  func.func @transform_0(%arg0: i32, %arg1: i32) -> (i32, i32) {
    %c0_i32 = arith.constant 0 : i32
    %c0_i32_0 = arith.constant 0 : i32
    %c0_i32_1 = arith.constant 0 : i32
    return %c0_i32, %c0_i32_0 : i32, i32
  }
  func.func @transform_1(%arg0: i32, %arg1: i32) -> (i32, i32) {
    %c0_i32 = arith.constant 0 : i32
    %c0_i32_0 = arith.constant 0 : i32
    %c0_i32_1 = arith.constant 0 : i32
    return %c0_i32, %c0_i32_0 : i32, i32
  }
  func.func @transform_2(%arg0: i32, %arg1: i32) -> (i32, i32) {
    %c0_i32 = arith.constant 0 : i32
    return %arg0, %arg1 : i32, i32
  }
  func.func @transform_3(%arg0: i32, %arg1: i32) -> (i32, i32) {
    %c0_i32 = arith.constant 0 : i32
    return %arg0, %arg1 : i32, i32
  }
}

</mosaic_0001>

<llo_original>
// kernel: tpu_custom_call.1
$region0: #{tpu_custom_call.1}
  #allocation0 [shape = 'u32[]', space=smem, size = 0x4, offset = 0x4, fixed_abs, tag = 'smem constant byte address 0x4 - core index']
  #allocation1 [shape = 'u32[144,128]{1,0:T(1,128)}', space=vmem, size = 0x12000, scoped, tag = 'internal scratch']
  #allocation2 [shape = 'f32[1,1]{1,0:T(1,128)S(6)}', space=smem, size = 0x200, scoped, tag = 'scoped memory for tpu_custom_call.1']
  %s0 = inlined_call_operand.<no memory space> [shape: f32[1,1], index: 0, kind: input, shape index: {}]
  %s1 = inlined_call_operand.vmem [shape: f32[2,8], index: 1, kind: input, shape index: {}]
  %s2 = inlined_call_operand.hbm [shape: f32[8,256], index: 2, kind: input, shape index: {}]
  %s3 = inlined_call_operand.hbm [shape: f32[2,256], index: 3, kind: output, shape index: {}]
  %s4 = sld [smem:[#allocation0]]
  $region49: #{tpu_custom_call.1} parent=0
    _
  %s6 = ssub.s32 1, %s4
  %s7 = scalar_select 0, %s6, %s4
  %8 = sst [smem:[#allocation2]] %s0
  $region1: #{tpu_custom_call.1} parent=0
    #allocation3 [shape = 'u8[8192]{0}', space=vmem, size = 0x2000, scoped, tag = 'input window, operand 2']
    #allocation4 [shape = 's32[2]{0}', space=sflag, size = 0x8, scoped, tag = 'scoped memory for tpu_custom_call.1']
    #allocation5 [shape = 's32[2]{0}', space=sflag, size = 0x8, scoped, tag = 'scoped memory for tpu_custom_call.1']
    #allocation6 [shape = 'u8[2048]{0}', space=vmem, size = 0x800, scoped, tag = 'output window, operand 0']
    %9 = vsyncpa [#allocation4], 0
    %s10 = scalar_lea.sflag [#allocation4], 1
    %11 = vsyncpa %s10, 0
    %12 = vsyncpa [#allocation5], 0
    %s13 = scalar_lea.sflag [#allocation5], 1
    %14 = vsyncpa %s13, 0
    loop: start=0, step=1, limit=4
    $region2: #{tpu_custom_call.1} parent=1 // loop_pre_header
      _
    $region3: #{tpu_custom_call.1} parent=1 // loop_header
      %s16 = sphi 0, %s20
      %p17 = scmp.ge.s32.totalorder %s16, 4
      %s23 = sphi 0, %s35
      %s24 = sphi 0, %s31
      %s25 = sphi 0, %s23
      %s26 = sphi 0, %s24
      %s27 = sphi 0, %s25
      %s28 = sphi 0, %s26
      %s36 = sphi 0, %s36
      %s38 = sphi 0, %s36
      %s39 = sphi 0, %s38
      %s53 = sphi 0, %s39
      %s57 = sphi 0, %s57
      %s59 = sphi 0, %s57
      %s60 = sphi 0, %s59
      %s74 = sphi 0, %s60
      %s82 = sphi 0, %s84
      %s85 = sphi 0, %s82
      %s86 = sphi 0, %s85
      %s102 = sphi 0, %s86
      %s110 = sphi 0, %s112
      %s113 = sphi 0, %s110
      %s114 = sphi 0, %s113
      %s130 = sphi 0, %s114
    $region4: #{tpu_custom_call.1} parent=1 // loop_header_branch
      %19 = sbr.rel (%p17) target = $region8
    $region5: #{tpu_custom_call.1} parent=1 // loop_body
      %s21 = ssub.s32 %s16, 1
      %s22 = ssub.s32 %s16, 2
      %s29 = sadd.s32 1, %s24
      %p30 = scmp.ge.s32.totalorder %s29, 2
      %s31 = scalar_select %p30, 0, %s29
      %s32 = sadd.s32 1, %s23
      %s33 = scalar_select %p30, %s32, %s23
      %p34 = scmp.ge.s32.totalorder %s33, 1
      %s35 = scalar_select %p34, 0, %s33
      %s37 = sadd.s32 %s36, 1
      %p40 = scmp.eq.s32.totalorder %s16, 1
      %p41 = scmp.ne.s32.totalorder %s36, %s38
      %p42 = scmp.eq.s32.totalorder %s16, 0
      %p43 = por %p41, %p42
      %p44 = scmp.ne.s32.totalorder %s36, %s38
      %p45 = scmp.eq.s32.totalorder %s21, 1
      %p46 = por %p44, %p45
      %p47 = scmp.ne.s32.totalorder %s38, %s39
      %p48 = scmp.eq.s32.totalorder %s21, 0
      %p49 = por %p47, %p48
      %p50 = scmp.ne.s32.totalorder %s38, %s39
      %p51 = scmp.eq.s32.totalorder %s22, 1
      %p52 = por %p50, %p51
      %p54 = scmp.ne.s32.totalorder %s39, %s53
      %p55 = scmp.eq.s32.totalorder %s22, 0
      %p56 = por %p54, %p55
      %s58 = sadd.s32 %s57, 1
      %p61 = scmp.eq.s32.totalorder %s16, 1
      %p62 = scmp.ne.s32.totalorder %s57, %s59
      %p63 = scmp.eq.s32.totalorder %s16, 0
      %p64 = por %p62, %p63
      %p65 = scmp.ne.s32.totalorder %s57, %s59
      %p66 = scmp.eq.s32.totalorder %s21, 1
      %p67 = por %p65, %p66
      %p68 = scmp.ne.s32.totalorder %s59, %s60
      %p69 = scmp.eq.s32.totalorder %s21, 0
      %p70 = por %p68, %p69
      %p71 = scmp.ne.s32.totalorder %s59, %s60
      %p72 = scmp.eq.s32.totalorder %s22, 1
      %p73 = por %p71, %p72
      %p75 = scmp.ne.s32.totalorder %s60, %s74
      %p76 = scmp.eq.s32.totalorder %s22, 0
      %p77 = por %p75, %p76
      %s78 = ssub.s32 %s23, %s35
      %s79 = ssub.s32 %s24, %s31
      %s80 = sor.u32 %s78, %s79
      %p81 = scmp.eq.s32.totalorder %s80, 0
      %s83 = sadd.s32 %s82, 1
      %s84 = scalar_select %p81, %s82, %s83
      %p87 = pneg %p81
      %p88 = scmp.eq.s32.totalorder %s16, 1
      %p89 = por %p87, %p88
      %p90 = scmp.ne.s32.totalorder %s82, %s85
      %p91 = scmp.eq.s32.totalorder %s16, 0
      %p92 = por %p90, %p91
      %p93 = scmp.ne.s32.totalorder %s82, %s85
      %p94 = scmp.eq.s32.totalorder %s21, 1
      %p95 = por %p93, %p94
      %p96 = scmp.ne.s32.totalorder %s85, %s86
      %p97 = scmp.eq.s32.totalorder %s21, 0
      %p98 = por %p96, %p97
      %p99 = scmp.ne.s32.totalorder %s85, %s86
      %p100 = scmp.eq.s32.totalorder %s22, 1
      %p101 = por %p99, %p100
      %p103 = scmp.ne.s32.totalorder %s86, %s102
      %p104 = scmp.eq.s32.totalorder %s22, 0
      %p105 = por %p103, %p104
      %s106 = ssub.s32 %s23, %s35
      %s107 = ssub.s32 %s24, %s31
      %s108 = sor.u32 %s106, %s107
      %p109 = scmp.eq.s32.totalorder %s108, 0
      %s111 = sadd.s32 %s110, 1
      %s112 = scalar_select %p109, %s110, %s111
      %p115 = pneg %p109
      %p116 = scmp.eq.s32.totalorder %s16, 1
      %p117 = por %p115, %p116
      %p118 = scmp.ne.s32.totalorder %s110, %s113
      %p119 = scmp.eq.s32.totalorder %s16, 0
      %p120 = por %p118, %p119
      %p121 = scmp.ne.s32.totalorder %s110, %s113
      %p122 = scmp.eq.s32.totalorder %s21, 1
      %p123 = por %p121, %p122
      %p124 = scmp.ne.s32.totalorder %s113, %s114
      %p125 = scmp.eq.s32.totalorder %s21, 0
      %p126 = por %p124, %p125
      %p127 = scmp.ne.s32.totalorder %s113, %s114
      %p128 = scmp.eq.s32.totalorder %s22, 1
      %p129 = por %p127, %p128
      %p131 = scmp.ne.s32.totalorder %s114, %s130
      %p132 = scmp.eq.s32.totalorder %s22, 0
      %p133 = por %p131, %p132
      %p134 = scmp.le.s32.totalorder 1, %s16
      %p135 = scmp.lt.s32.totalorder %s16, 3
      %p136 = pnand %p134, %p135
      %p137 = pneg %p136
      // Predicated region
      $region9: #{tpu_custom_call.1} parent=5 // pred_check
        _
      $region10: #{tpu_custom_call.1} parent=5 // pred_check_branch
        %139 = sbr.rel (%p136) target = $region12
      $region11: #{tpu_custom_call.1} parent=5 // pred_region
        %s140 = ssub.s32 %s16, 1
        // Predicated region
        $region13: #{tpu_custom_call.1} parent=11 // pred_check
          %p141 = pneg %p49
        $region14: #{tpu_custom_call.1} parent=11 // pred_check_branch
          %143 = sbr.rel (%p141) target = $region16
        $region15: #{tpu_custom_call.1} parent=11 // pred_region
          _
        $region16: #{tpu_custom_call.1} parent=11 // pred_fallthru
          _
        // Predicated region
        $region17: #{tpu_custom_call.1} parent=11 // pred_check
          %p144 = pneg %p70
        $region18: #{tpu_custom_call.1} parent=11 // pred_check_branch
          %146 = sbr.rel (%p144) target = $region20
        $region19: #{tpu_custom_call.1} parent=11 // pred_region
          _
        $region20: #{tpu_custom_call.1} parent=11 // pred_fallthru
          _
      $region12: #{tpu_custom_call.1} parent=5 // pred_fallthru
        _
      %p147 = scmp.lt.s32.totalorder %s16, 2
      // Predicated region
      $region21: #{tpu_custom_call.1} parent=5 // pred_check
        %p148 = pneg %p147
      $region22: #{tpu_custom_call.1} parent=5 // pred_check_branch
        %150 = sbr.rel (%p148) target = $region24
      $region23: #{tpu_custom_call.1} parent=5 // pred_region
        // Predicated region
        $region25: #{tpu_custom_call.1} parent=23 // pred_check
          %p151 = pneg %p92
        $region26: #{tpu_custom_call.1} parent=23 // pred_check_branch
          %153 = sbr.rel (%p151) target = $region28
        $region27: #{tpu_custom_call.1} parent=23 // pred_region
          %s154 = sand.u32 %s82, 1
          %s155 = scalar_lea.sflag [#allocation4], %s154
          %s156 = sand.u32 %s82, 1
          %s157 = smul.addr %s156, 8
          %s158 = scalar_lea.vmem [#allocation3], %s157
          %s160 = ssub.s32 128, 128
          %161 = vsyncadd %s155, %s160
          %s162 = smul.addr %s23, 2
          %s163 = sadd.s32 %s24, %s162
          %s164 = smul.addr %s163, 128
          %s165 = scalar_lea.hbm %s2, %s164
          %s167 = sshll.u32 %s158, 4
          %s168 = int_to_ptr.vmem [resolvable:$true] %s167
          %170 = dma.hbm_to_vmem [thread:$0]  %s165, 128, %s168, %s155
        $region28: #{tpu_custom_call.1} parent=23 // pred_fallthru
          _
      $region24: #{tpu_custom_call.1} parent=5 // pred_fallthru
        _
      %p171 = scmp.le.s32.totalorder 1, %s16
      %p172 = scmp.lt.s32.totalorder %s16, 3
      %p173 = pnand %p171, %p172
      %p174 = pneg %p173
      // Predicated region
      $region29: #{tpu_custom_call.1} parent=5 // pred_check
        _
      $region30: #{tpu_custom_call.1} parent=5 // pred_check_branch
        %176 = sbr.rel (%p173) target = $region32
      $region31: #{tpu_custom_call.1} parent=5 // pred_region
        %s177 = ssub.s32 %s16, 1
        %s178 = sand.u32 %s85, 1
        %s179 = scalar_lea.sflag [#allocation4], %s178
        %s180 = sand.u32 %s85, 1
        %s181 = smul.addr %s180, 8
        %s182 = scalar_lea.vmem [#allocation3], %s181
        // Predicated region
        $region33: #{tpu_custom_call.1} parent=31 // pred_check
          %p183 = pneg %p98
        $region34: #{tpu_custom_call.1} parent=31 // pred_check_branch
          %185 = sbr.rel (%p183) target = $region36
        $region35: #{tpu_custom_call.1} parent=31 // pred_region
          %186 = dma.done %s179, 128
        $region36: #{tpu_custom_call.1} parent=31 // pred_fallthru
          _
        %p187 = pneg %p49
        %p188 = pneg %p46
        %p189 = pneg %p70
        %p190 = pneg %p67
        %s191 = sand.u32 %s85, 1
        %s192 = scalar_lea.sflag [#allocation4], %s191
        %s193 = sand.u32 %s85, 1
        %s194 = smul.addr %s193, 8
        %s195 = scalar_lea.vmem [#allocation3], %s194
        %p196 = pneg %p98
        %p197 = pneg %p95
        %p198 = pneg %p126
        %p199 = pneg %p123
        %s200 = sand.u32 %s113, 1
        %s201 = scalar_lea.sflag [#allocation5], %s200
        %s202 = sand.u32 %s113, 1
        %s203 = smul.addr %s202, 2
        %s204 = scalar_lea.vmem [#allocation6], %s203
        %v205 = vld [vmem:[%s1] sm:$0x3]
        %v206 = vld [vmem:[%s182] sm:$0xff]
        %s207 = sld [smem:[#allocation2]]
        %v208 = vstv %s207
        %vm209 = vcmask 64512
        %v211 = vsel %vm209, %v205, 0
        %213 = vmatprep.subr.mxu0 0.0
        %214 = vmatpush1.msra.mxu0 %v206
        %215 = vmatprep.subr.mxu0 0.0
        %216 = vmatpush1.msra.mxu0 0.0
        %217 = vmatprep.subr.mxu0 0.0
        %218 = vmatpush1.msra.mxu0 0.0
        %219 = vmatprep.subr.mxu0 0.0
        %220 = vmatpush1.msra.mxu0 0.0
        %221 = vmatprep.subr.mxu0 0.0
        %222 = vmatpush1.msra.mxu0 0.0
        %223 = vmatprep.subr.mxu0 0.0
        %224 = vmatpush1.msra.mxu0 0.0
        %225 = vmatprep.subr.mxu0 0.0
        %226 = vmatpush1.msra.mxu0 0.0
        %227 = vmatprep.subr.mxu0 0.0
        %228 = vmatpush1.msra.mxu0 0.0
        %229 = vmatprep.subr.mxu0 0.0
        %230 = vmatpush1.msra.mxu0 0.0
        %231 = vmatprep.subr.mxu0 0.0
        %232 = vmatpush1.msra.mxu0 0.0
        %233 = vmatprep.subr.mxu0 0.0
        %234 = vmatpush1.msra.mxu0 0.0
        %235 = vmatprep.subr.mxu0 0.0
        %236 = vmatpush1.msra.mxu0 0.0
        %237 = vmatprep.subr.mxu0 0.0
        %238 = vmatpush1.msra.mxu0 0.0
        %239 = vmatprep.subr.mxu0 0.0
        %240 = vmatpush1.msra.mxu0 0.0
        %241 = vmatprep.subr.mxu0 0.0
        %242 = vmatpush1.msra.mxu0 0.0
        %243 = vmatprep.subr.mxu0 0.0
        %244 = vmatpush1.msra.mxu0 0.0
        %245 = vmatprep.subr.mxu0 0.0
        %246 = vmatpush1.msra.mxu0 0.0
        %247 = vmatprep.subr.mxu0 0.0
        %248 = vmatpush1.msra.mxu0 0.0
        %249 = vmatprep.subr.mxu0 0.0
        %250 = vmatpush1.msra.mxu0 0.0
        %251 = vmatprep.subr.mxu0 0.0
        %252 = vmatpush1.msra.mxu0 0.0
        %253 = vmatprep.subr.mxu0 0.0
        %254 = vmatpush1.msra.mxu0 0.0
        %255 = vmatprep.subr.mxu0 0.0
        %256 = vmatpush1.msra.mxu0 0.0
        %257 = vmatprep.subr.mxu0 0.0
        %258 = vmatpush1.msra.mxu0 0.0
        %259 = vmatprep.subr.mxu0 0.0
        %260 = vmatpush1.msra.mxu0 0.0
        %261 = vmatprep.subr.mxu0 0.0
        %262 = vmatpush1.msra.mxu0 0.0
        %263 = vmatprep.subr.mxu0 0.0
        %264 = vmatpush1.msra.mxu0 0.0
        %265 = vmatprep.subr.mxu0 0.0
        %266 = vmatpush1.msra.mxu0 0.0
        %267 = vmatprep.subr.mxu0 0.0
        %268 = vmatpush1.msra.mxu0 0.0
        %269 = vmatprep.subr.mxu0 0.0
        %270 = vmatpush1.msra.mxu0 0.0
        %271 = vmatprep.subr.mxu0 0.0
        %272 = vmatpush1.msra.mxu0 0.0
        %273 = vmatprep.subr.mxu0 0.0
        %274 = vmatpush1.msra.mxu0 0.0
        %275 = vmatprep.subr.mxu0 0.0
        %276 = vmatpush1.msra.mxu0 0.0
        %277 = vmatprep.mubr.f32.mxu0 0.0
        %278 = vmatmul.mubr.f32.gmra.mrb[0].mxu0 %v211
        %v279 = vpop.f32.mrb[0].mxu0
        %v280 = vadd.f32 %v208, %v279
        %v281 = vpop.f32.mrb[0].mxu0
        %282 = vdwg.mxu0
        %283 = vst [vmem:[%s204] sm:$0x3] %v280
        %s284 = sand.u32 %s113, 1
        %s285 = scalar_lea.sflag [#allocation5], %s284
        %s286 = sand.u32 %s113, 1
        %s287 = smul.addr %s286, 2
        %s288 = scalar_lea.vmem [#allocation6], %s287
        // Predicated region
        $region37: #{tpu_custom_call.1} parent=31 // pred_check
          %p289 = pneg %p123
        $region38: #{tpu_custom_call.1} parent=31 // pred_check_branch
          %291 = sbr.rel (%p289) target = $region40
        $region39: #{tpu_custom_call.1} parent=31 // pred_region
          %s293 = ssub.s32 32, 32
          %294 = vsyncadd %s285, %s293
          %s295 = smul.addr %s25, 2
          %s296 = sadd.s32 %s26, %s295
          %s297 = smul.addr %s296, 32
          %s298 = scalar_lea.hbm %s3, %s297
          %s300 = sshll.u32 %s288, 4
          %s301 = int_to_ptr.vmem [resolvable:$true] %s300
          %303 = dma.vmem_to_hbm [thread:$0]  %s301, 32, %s298, %s285
        $region40: #{tpu_custom_call.1} parent=31 // pred_fallthru
          _
      $region32: #{tpu_custom_call.1} parent=5 // pred_fallthru
        _
      %p304 = scmp.le.s32.totalorder 2, %s16
      // Predicated region
      $region41: #{tpu_custom_call.1} parent=5 // pred_check
        %p305 = pneg %p304
      $region42: #{tpu_custom_call.1} parent=5 // pred_check_branch
        %307 = sbr.rel (%p305) target = $region44
      $region43: #{tpu_custom_call.1} parent=5 // pred_region
        %s308 = ssub.s32 %s16, 2
        // Predicated region
        $region45: #{tpu_custom_call.1} parent=43 // pred_check
          %p309 = pneg %p129
        $region46: #{tpu_custom_call.1} parent=43 // pred_check_branch
          %311 = sbr.rel (%p309) target = $region48
        $region47: #{tpu_custom_call.1} parent=43 // pred_region
          %s312 = sand.u32 %s114, 1
          %s313 = scalar_lea.sflag [#allocation5], %s312
          %s314 = sand.u32 %s114, 1
          %s315 = smul.addr %s314, 2
          %s316 = scalar_lea.vmem [#allocation6], %s315
          %317 = dma.done %s313, 32
        $region48: #{tpu_custom_call.1} parent=43 // pred_fallthru
          _
      $region44: #{tpu_custom_call.1} parent=5 // pred_fallthru
        _
    $region6: #{tpu_custom_call.1} parent=1 // loop_footer
      %s20 = sadd.s32 1, %s16
    $region7: #{tpu_custom_call.1} parent=1 // loop_footer_branch
      %15 = sbr.rel target = $region3
    $region8: #{tpu_custom_call.1} parent=1 // loop_exit
      _
    %318 = vsyncpa [#allocation4], 1
    %s319 = scalar_lea.sflag [#allocation4], 1
    %320 = vsyncpa %s319, 1
    %321 = vsyncpa [#allocation5], 1
    %s322 = scalar_lea.sflag [#allocation5], 1
    %323 = vsyncpa %s322, 1

</llo_original>
